<compile_context>
chip_gen: v6e
topology: v6e:2x2x1
jax: 0.10.0
libtpu: 0.0.40
codegen_flags: <defaults>
</compile_context>

<pallas_src>
import jax
import jax.numpy as jnp
from jax.experimental import pallas as pl
from jax.experimental.pallas import tpu as pltpu

HIDDEN = 1024  # hard-coded in the PyTorch module (nn.Linear(..., 1024))


def _round_up(x: int, m: int) -> int:
    return (x + m - 1) // m * m


def _obj_net_kernel(num_o: int):
    """Returns the Pallas kernel body; num_o is a static Python int."""
    inv_o = 1.0 / float(num_o)  # fold the mean's 1/O into one scalar multiply

    def kernel(obj_ref, wo_ref, bo_ref, out_ref):
        # obj_ref : [TILE_BF, O, Da] f32   (HBM->VMEM pipelined tile)
        # wo_ref  : [Da, HIDDEN]     bf16  (resident, constant index_map)
        # bo_ref  : [1, HIDDEN]      f32   (resident, constant index_map)
        # out_ref : [TILE_BF, HIDDEN] f32
        obj_mean = jnp.sum(obj_ref[...], axis=1) * inv_o          # [TILE_BF, Da] f32
        acc = jnp.dot(obj_mean.astype(jnp.bfloat16), wo_ref[...],
                      preferred_element_type=jnp.float32)          # MXU, f32 acc
        out_ref[...] = (acc + bo_ref[...]).astype(out_ref.dtype)

    return kernel


def obj_net_forward(cnn_feats, object_feat, params, *, tile_bf=256):
    """cnn_feats: [B,F,Dc] f32, object_feat: [B,F,O,Da] f32 -> [B,F,1024] (squeezed)."""
    wc, bc, wo, bo, wa, ba = params
    # cnn_feats / wc / bc / wa / ba only feed the size-1 softmax path, which is
    # identically 1 -> they do not influence the output (see header comment).
    del cnn_feats, wc, bc, wa, ba

    B, F, O, Da = object_feat.shape
    BF = B * F

    tile_bf = min(tile_bf, _round_up(BF, 8))      # small problems: one tile
    bf_pad = _round_up(BF, tile_bf)               # pad rows so grid divides evenly

    obj = object_feat.reshape(BF, O, Da)
    if bf_pad != BF:
        obj = jnp.pad(obj, ((0, bf_pad - BF), (0, 0), (0, 0)))

    wo_bf16 = wo.astype(jnp.bfloat16)             # halve weight DMA, MXU-native
    bo_f32 = bo.reshape(1, HIDDEN).astype(jnp.float32)

    grid = (bf_pad // tile_bf,)
    cost = pl.CostEstimate(
        flops=2 * bf_pad * O * Da + 2 * bf_pad * Da * HIDDEN,
        transcendentals=0,
        bytes_accessed=(bf_pad * O * Da * 4          # object_feat tile stream
                        + Da * HIDDEN * 2            # bf16 weight
                        + HIDDEN * 4                 # bias
                        + bf_pad * HIDDEN * 4),      # output
    )

    out = pl.pallas_call(
        _obj_net_kernel(O),
        out_shape=jax.ShapeDtypeStruct((bf_pad, HIDDEN), jnp.float32),
        grid_spec=pltpu.PrefetchScalarGridSpec(
            num_scalar_prefetch=0,
            grid=grid,
            in_specs=[
                pl.BlockSpec((tile_bf, O, Da), lambda i: (i, 0, 0)),
                pl.BlockSpec((Da, HIDDEN), lambda i: (0, 0)),
                pl.BlockSpec((1, HIDDEN), lambda i: (0, 0)),
            ],
            out_specs=pl.BlockSpec((tile_bf, HIDDEN), lambda i: (i, 0)),
        ),
        compiler_params=pltpu.CompilerParams(
            dimension_semantics=("parallel",),       # megacore split on v7x
            vmem_limit_bytes=32 * 1024 * 1024,       # sized for v7x (64 MiB phys)
        ),
        cost_estimate=cost,
    )(obj, wo_bf16, bo_f32)

    out = out[:BF].reshape(B, F, HIDDEN)
    return jnp.squeeze(out)  # mirrors torch .squeeze()


def init_params(key, a_feature_size, m_feature_size):
    """Deterministic synthetic weights; stored as [in, out] (transposed vs torch)."""
    ks = jax.random.split(key, 6)
    dc = a_feature_size + m_feature_size
    da = a_feature_size
    wc = jax.random.normal(ks[0], (dc, HIDDEN), jnp.float32) * 0.02
    bc = jax.random.normal(ks[1], (1, HIDDEN), jnp.float32) * 0.02
    wo = jax.random.normal(ks[2], (da, HIDDEN), jnp.float32) * 0.02
    bo = jax.random.normal(ks[3], (1, HIDDEN), jnp.float32) * 0.02
    wa = jax.random.normal(ks[4], (1, HIDDEN), jnp.float32) * 0.02  # att weight [1024->1]
    ba = jax.random.normal(ks[5], (1, 1), jnp.float32) * 0.02
    return (wc, bc, wo, bo, wa, ba)


def reference_forward(cnn_feats, object_feat, params):
    """Plain-JAX reference reproducing the FULL PyTorch forward graph (f32)."""
    wc, bc, wo, bo, wa, ba = params
    cnn_proj = cnn_feats @ wc + bc[0]                       # [B,F,H]
    obj_proj = object_feat @ wo + bo[0]                     # [B,F,O,H]
    att_feat = cnn_proj[:, :, None, :] * obj_proj           # [B,F,O,H]
    att_score = jnp.sum(att_feat * wa[0], axis=-1, keepdims=True) + ba[0, 0]
    att_score = jax.nn.softmax(att_score, axis=-1)          # size-1 axis -> ones
    agg = jnp.mean(att_score * obj_proj, axis=2)            # [B,F,H]
    return jnp.squeeze(agg)


if __name__ == "__main__":
    # Small, module-consistent shapes: a_feature_size=128, m_feature_size=128
    B, F, O = 2, 4, 8
    A_FEAT, M_FEAT = 128, 128

    key = jax.random.PRNGKey(0)
    k_cnn, k_obj, k_par = jax.random.split(key, 3)

    cnn_feats = jax.random.normal(k_cnn, (B, F, A_FEAT + M_FEAT), jnp.float32)
    object_feat = jax.random.normal(k_obj, (B, F, O, A_FEAT), jnp.float32)
    params = init_params(k_par, A_FEAT, M_FEAT)

    out = obj_net_forward(cnn_feats, object_feat, params)
    out = jax.block_until_ready(out)

    ref = reference_forward(cnn_feats, object_feat, params)
    assert out.shape == ref.shape, (out.shape, ref.shape)
    # bf16 MXU operands -> compare against the f32 full-graph reference with a
    # bf16-appropriate tolerance (observed max |err| ~1e-3).
    assert jnp.allclose(out, ref, atol=2e-2, rtol=2e-2), "mismatch vs JAX reference"

    print("KERNEL_OK")
</pallas_src>

<mosaic_0001>
module attributes {stable_mosaic.version = 11 : i64} {
  func.func @kernel(%arg0: i32, %arg1: memref<8x8x128xf32, #tpu.memory_space<vmem>>, %arg2: memref<128x1024xbf16, #tpu.memory_space<vmem>>, %arg3: memref<1x1024xf32, #tpu.memory_space<vmem>>, %arg4: memref<8x1024xf32, #tpu.memory_space<vmem>>) attributes {dimension_semantics = [#tpu.dimension_semantics<parallel>], iteration_bounds = array<i64: 1>, scalar_prefetch = 0 : i64, scratch_operands = 0 : i64, tpu.core_type = #tpu.core_type<tc>, window_params = [{transform_indices = @transform_0, window_bounds = array<i64: 8, 8, 128>}, {pipeline_mode = #tpu.pipeline_mode<synchronous>, transform_indices = @transform_1, window_bounds = array<i64: 128, 1024>}, {pipeline_mode = #tpu.pipeline_mode<synchronous>, transform_indices = @transform_2, window_bounds = array<i64: 1, 1024>}, {transform_indices = @transform_3, window_bounds = array<i64: 8, 1024>}]} {
    %c0 = arith.constant 0 : index
    %c0_0 = arith.constant 0 : index
    %c0_1 = arith.constant 0 : index
    %0 = vector.load %arg1[%c0, %c0_0, %c0_1] : memref<8x8x128xf32, #tpu.memory_space<vmem>>, vector<8x8x128xf32>
    %cst = arith.constant dense<0.000000e+00> : vector<8x128xf32>
    %1 = vector.multi_reduction <add>, %0, %cst [1] : vector<8x8x128xf32> to vector<8x128xf32>
    %cst_2 = arith.constant 1.250000e-01 : f32
    %2 = vector.broadcast %cst_2 : f32 to vector<8x128xf32>
    %3 = arith.mulf %1, %2 : vector<8x128xf32>
    %4 = arith.truncf %3 : vector<8x128xf32> to vector<8x128xbf16>
    %c0_3 = arith.constant 0 : index
    %c0_4 = arith.constant 0 : index
    %5 = vector.load %arg2[%c0_3, %c0_4] : memref<128x1024xbf16, #tpu.memory_space<vmem>>, vector<128x1024xbf16>
    %cst_5 = arith.constant dense<0.000000e+00> : vector<8x1024xf32>
    %6 = tpu.matmul %4, %5, %cst_5 {dimension_numbers = #tpu.dot_dimension_numbers<[1], [0], [0], [1], [0, 0, 1, 1], [], []>} : vector<8x128xbf16>, vector<128x1024xbf16>, vector<8x1024xf32> -> vector<8x1024xf32>
    %c0_6 = arith.constant 0 : index
    %c0_7 = arith.constant 0 : index
    %7 = vector.load %arg3[%c0_6, %c0_7] : memref<1x1024xf32, #tpu.memory_space<vmem>>, vector<1x1024xf32>
    %8 = vector.broadcast %7 : vector<1x1024xf32> to vector<8x1024xf32>
    %9 = arith.addf %6, %8 : vector<8x1024xf32>
    %c0_8 = arith.constant 0 : index
    %c0_9 = arith.constant 0 : index
    %10 = vector.load %arg4[%c0_8, %c0_9] : memref<8x1024xf32, #tpu.memory_space<vmem>>, vector<8x1024xf32>
    tpu.vector_store %arg4[%c0_8, %c0_9], %9 {strides = array<i32>} : memref<8x1024xf32, #tpu.memory_space<vmem>>, vector<8x1024xf32>,
    return
  }
  func.func @transform_0(%arg0: i32) -> (i32, i32, i32) {
    %c0_i32 = arith.constant 0 : i32
    %c0_i32_0 = arith.constant 0 : i32
    %c0_i32_1 = arith.constant 0 : i32
    return %arg0, %c0_i32, %c0_i32_0 : i32, i32, i32
  }
  func.func @transform_1(%arg0: i32) -> (i32, i32) {
    %c0_i32 = arith.constant 0 : i32
    %c0_i32_0 = arith.constant 0 : i32
    %c0_i32_1 = arith.constant 0 : i32
    return %c0_i32, %c0_i32_0 : i32, i32
  }
  func.func @transform_2(%arg0: i32) -> (i32, i32) {
    %c0_i32 = arith.constant 0 : i32
    %c0_i32_0 = arith.constant 0 : i32
    %c0_i32_1 = arith.constant 0 : i32
    return %c0_i32, %c0_i32_0 : i32, i32
  }
  func.func @transform_3(%arg0: i32) -> (i32, i32) {
    %c0_i32 = arith.constant 0 : i32
    %c0_i32_0 = arith.constant 0 : i32
    return %arg0, %c0_i32 : i32, i32
  }
}

</mosaic_0001>

<llo_original>
// kernel: tpu_custom_call.1
$region0: #{tpu_custom_call.1}
  #allocation0 [shape = 'u32[]', space=smem, size = 0x4, offset = 0x4, fixed_abs, tag = 'smem constant byte address 0x4 - core index']
  #allocation1 [shape = 'u32[144,128]{1,0:T(1,128)}', space=vmem, size = 0x12000, scoped, tag = 'internal scratch']
  %s0 = inlined_call_operand.hbm [shape: f32[8,8,128], index: 0, kind: input, shape index: {}]
  %s1 = inlined_call_operand.hbm [shape: bf16[128,1024], index: 1, kind: input, shape index: {}]
  %s2 = inlined_call_operand.hbm [shape: f32[1,1024], index: 2, kind: input, shape index: {}]
  %s3 = inlined_call_operand.hbm [shape: f32[8,1024], index: 3, kind: output, shape index: {}]
  %s4 = sld [smem:[#allocation0]]
  $region34: #{tpu_custom_call.1} parent=0
    _
  %s6 = ssub.s32 1, %s4
  %s7 = scalar_select 0, %s6, %s4
  $region1: #{tpu_custom_call.1} parent=0
    #allocation2 [shape = 'u8[32768]{0}', space=vmem, size = 0x8000, scoped, tag = 'input window, operand 0, single buffered']
    #allocation3 [shape = 's32[1]{0}', space=sflag, size = 0x4, scoped, tag = 'scoped memory for tpu_custom_call.1']
    #allocation4 [shape = 's32[1]{0}', space=sflag, size = 0x4, scoped, tag = 'scoped memory for tpu_custom_call.1']
    #allocation5 [shape = 'u8[262144]{0}', space=vmem, size = 0x40000, scoped, tag = 'input window, operand 1, single buffered']
    #allocation6 [shape = 's32[1]{0}', space=sflag, size = 0x4, scoped, tag = 'scoped memory for tpu_custom_call.1']
    #allocation7 [shape = 'u8[4096]{0}', space=vmem, size = 0x1000, scoped, tag = 'input window, operand 2, single buffered']
    #allocation8 [shape = 'u8[32768]{0}', space=vmem, size = 0x8000, scoped, tag = 'output window, operand 0, single buffered']
    %8 = vsyncpa [#allocation3], 0
    %9 = vsyncpa [#allocation6], 0
    %10 = vsyncpa [#allocation4], 0
    // Predicated region
    $region2: #{tpu_custom_call.1} parent=1 // pred_check
      _
    $region3: #{tpu_custom_call.1} parent=1 // pred_check_branch
      %12 = sbr.rel (0) target = $region5
    $region4: #{tpu_custom_call.1} parent=1 // pred_region
      %s14 = ssub.s32 1024, 1024
      %15 = vsyncadd [#allocation3], %s14
      %s16 = sshll.u32 [#allocation2], 4
      %s17 = int_to_ptr.vmem [resolvable:$true] %s16
      %22 = dma.hbm_to_vmem [thread:$0]  %s0, 1024, %s17, [#allocation3], 128, 128, 8
    $region5: #{tpu_custom_call.1} parent=1 // pred_fallthru
      _
    // Predicated region
    $region6: #{tpu_custom_call.1} parent=1 // pred_check
      _
    $region7: #{tpu_custom_call.1} parent=1 // pred_check_branch
      %24 = sbr.rel (0) target = $region9
    $region8: #{tpu_custom_call.1} parent=1 // pred_region
      %s26 = ssub.s32 8192, 8192
      %27 = vsyncadd [#allocation6], %s26
      %s28 = sshll.u32 [#allocation5], 4
      %s29 = int_to_ptr.vmem [resolvable:$true] %s28
      %34 = dma.hbm_to_vmem [thread:$0]  %s1, 8192, %s29, [#allocation6], 512, 512, 32
    $region9: #{tpu_custom_call.1} parent=1 // pred_fallthru
      _
    // Predicated region
    $region10: #{tpu_custom_call.1} parent=1 // pred_check
      _
    $region11: #{tpu_custom_call.1} parent=1 // pred_check_branch
      %36 = sbr.rel (0) target = $region13
    $region12: #{tpu_custom_call.1} parent=1 // pred_region
      %s38 = ssub.s32 128, 128
      %39 = vsyncadd [#allocation6], %s38
      %s41 = sshll.u32 [#allocation7], 4
      %s42 = int_to_ptr.vmem [resolvable:$true] %s41
      %44 = dma.hbm_to_vmem [thread:$0]  %s2, 128, %s42, [#allocation6]
    $region13: #{tpu_custom_call.1} parent=1 // pred_fallthru
      _
    // Predicated region
    $region14: #{tpu_custom_call.1} parent=1 // pred_check
      _
    $region15: #{tpu_custom_call.1} parent=1 // pred_check_branch
      %46 = sbr.rel (0) target = $region17
    $region16: #{tpu_custom_call.1} parent=1 // pred_region
      %47 = dma.done [#allocation3], 1024
    $region17: #{tpu_custom_call.1} parent=1 // pred_fallthru
      _
    // Predicated region
    $region18: #{tpu_custom_call.1} parent=1 // pred_check
      _
    $region19: #{tpu_custom_call.1} parent=1 // pred_check_branch
      %49 = sbr.rel (0) target = $region21
    $region20: #{tpu_custom_call.1} parent=1 // pred_region
      %50 = dma.done [#allocation6], 8192
    $region21: #{tpu_custom_call.1} parent=1 // pred_fallthru
      _
    // Predicated region
    $region22: #{tpu_custom_call.1} parent=1 // pred_check
      _
    $region23: #{tpu_custom_call.1} parent=1 // pred_check_branch
      %52 = sbr.rel (0) target = $region25
    $region24: #{tpu_custom_call.1} parent=1 // pred_region
      %53 = dma.done [#allocation6], 128
    $region25: #{tpu_custom_call.1} parent=1 // pred_fallthru
      _
    %v55 = vld [vmem:[#allocation2] sm:$0xff]
    %v56 = vld [vmem:[#allocation2 + $0x8] sm:$0xff]
    %v57 = vld [vmem:[#allocation2 + $0x10] sm:$0xff]
    %v58 = vld [vmem:[#allocation2 + $0x18] sm:$0xff]
    %v59 = vld [vmem:[#allocation2 + $0x20] sm:$0xff]
    %v60 = vld [vmem:[#allocation2 + $0x28] sm:$0xff]
    %v61 = vld [vmem:[#allocation2 + $0x30] sm:$0xff]
    %v62 = vld [vmem:[#allocation2 + $0x38] sm:$0xff]
    %v63 = vrot.slane %v55, 4
    %v64 = vadd.f32 %v55, %v63
    %v65 = vrot.slane %v64, 2
    %v66 = vadd.f32 %v64, %v65
    %v67 = vrot.slane %v66, 1
    %v68 = vadd.f32 %v66, %v67
    %v69 = vrot.slane %v56, 4
    %v70 = vadd.f32 %v56, %v69
    %v71 = vrot.slane %v70, 2
    %v72 = vadd.f32 %v70, %v71
    %v73 = vrot.slane %v72, 1
    %v74 = vadd.f32 %v72, %v73
    %v75 = vrot.slane %v57, 4
    %v76 = vadd.f32 %v57, %v75
    %v77 = vrot.slane %v76, 2
    %v78 = vadd.f32 %v76, %v77
    %v79 = vrot.slane %v78, 1
    %v80 = vadd.f32 %v78, %v79
    %v81 = vrot.slane %v58, 4
    %v82 = vadd.f32 %v58, %v81
    %v83 = vrot.slane %v82, 2
    %v84 = vadd.f32 %v82, %v83
    %v85 = vrot.slane %v84, 1
    %v86 = vadd.f32 %v84, %v85
    %v87 = vrot.slane %v59, 4
    %v88 = vadd.f32 %v59, %v87
    %v89 = vrot.slane %v88, 2
    %v90 = vadd.f32 %v88, %v89
    %v91 = vrot.slane %v90, 1
    %v92 = vadd.f32 %v90, %v91
    %v93 = vrot.slane %v60, 4
    %v94 = vadd.f32 %v60, %v93
    %v95 = vrot.slane %v94, 2
    %v96 = vadd.f32 %v94, %v95
    %v97 = vrot.slane %v96, 1
    %v98 = vadd.f32 %v96, %v97
    %v99 = vrot.slane %v61, 4
    %v100 = vadd.f32 %v61, %v99
    %v101 = vrot.slane %v100, 2
    %v102 = vadd.f32 %v100, %v101
    %v103 = vrot.slane %v102, 1
    %v104 = vadd.f32 %v102, %v103
    %v105 = vrot.slane %v62, 4
    %v106 = vadd.f32 %v62, %v105
    %v107 = vrot.slane %v106, 2
    %v108 = vadd.f32 %v106, %v107
    %v109 = vrot.slane %v108, 1
    %v110 = vadd.f32 %v108, %v109
    %v111 = vmul.f32 %v68, 0.125
    %v112 = vmul.f32 %v74, 0.125
    %v113 = vmul.f32 %v80, 0.125
    %v114 = vmul.f32 %v86, 0.125
    %v115 = vmul.f32 %v92, 0.125
    %v116 = vmul.f32 %v98, 0.125
    %v117 = vmul.f32 %v104, 0.125
    %v118 = vmul.f32 %v110, 0.125
    %v119 = vpack.c.bf16 %v111, %v111
    %v120 = vpack.c.bf16 %v112, %v112
    %v121 = vpack.c.bf16 %v113, %v113
    %v122 = vpack.c.bf16 %v114, %v114
    %v123 = vpack.c.bf16 %v115, %v115
    %v124 = vpack.c.bf16 %v116, %v116
    %v125 = vpack.c.bf16 %v117, %v117
    %v126 = vpack.c.bf16 %v118, %v118
    %v127 = vld [vmem:[#allocation5] sm:$0xff]
    %v128 = vld [vmem:[#allocation5 + $0x8] sm:$0xff]
    %v129 = vld [vmem:[#allocation5 + $0x10] sm:$0xff]
    %v130 = vld [vmem:[#allocation5 + $0x18] sm:$0xff]
    %v131 = vld [vmem:[#allocation5 + $0x20] sm:$0xff]
    %v132 = vld [vmem:[#allocation5 + $0x28] sm:$0xff]
    %v133 = vld [vmem:[#allocation5 + $0x30] sm:$0xff]
    %v134 = vld [vmem:[#allocation5 + $0x38] sm:$0xff]
    %v135 = vld [vmem:[#allocation5 + $0x40] sm:$0xff]
    %v136 = vld [vmem:[#allocation5 + $0x48] sm:$0xff]
    %v137 = vld [vmem:[#allocation5 + $0x50] sm:$0xff]
    %v138 = vld [vmem:[#allocation5 + $0x58] sm:$0xff]
    %v139 = vld [vmem:[#allocation5 + $0x60] sm:$0xff]
    %v140 = vld [vmem:[#allocation5 + $0x68] sm:$0xff]
    %v141 = vld [vmem:[#allocation5 + $0x70] sm:$0xff]
    %v142 = vld [vmem:[#allocation5 + $0x78] sm:$0xff]
    %v143 = vld [vmem:[#allocation5 + $0x80] sm:$0xff]
    %v144 = vld [vmem:[#allocation5 + $0x88] sm:$0xff]
    %v145 = vld [vmem:[#allocation5 + $0x90] sm:$0xff]
    %v146 = vld [vmem:[#allocation5 + $0x98] sm:$0xff]
    %v147 = vld [vmem:[#allocation5 + $0xa0] sm:$0xff]
    %v148 = vld [vmem:[#allocation5 + $0xa8] sm:$0xff]
    %v149 = vld [vmem:[#allocation5 + $0xb0] sm:$0xff]
    %v150 = vld [vmem:[#allocation5 + $0xb8] sm:$0xff]
    %v151 = vld [vmem:[#allocation5 + $0xc0] sm:$0xff]
    %v152 = vld [vmem:[#allocation5 + $0xc8] sm:$0xff]
    %v153 = vld [vmem:[#allocation5 + $0xd0] sm:$0xff]
    %v154 = vld [vmem:[#allocation5 + $0xd8] sm:$0xff]
    %v155 = vld [vmem:[#allocation5 + $0xe0] sm:$0xff]
    %v156 = vld [vmem:[#allocation5 + $0xe8] sm:$0xff]
    %v157 = vld [vmem:[#allocation5 + $0xf0] sm:$0xff]
    %v158 = vld [vmem:[#allocation5 + $0xf8] sm:$0xff]
    %v159 = vld [vmem:[#allocation5 + $0x100] sm:$0xff]
    %v160 = vld [vmem:[#allocation5 + $0x108] sm:$0xff]
    %v161 = vld [vmem:[#allocation5 + $0x110] sm:$0xff]
    %v162 = vld [vmem:[#allocation5 + $0x118] sm:$0xff]
    %v163 = vld [vmem:[#allocation5 + $0x120] sm:$0xff]
    %v164 = vld [vmem:[#allocation5 + $0x128] sm:$0xff]
    %v165 = vld [vmem:[#allocation5 + $0x130] sm:$0xff]
    %v166 = vld [vmem:[#allocation5 + $0x138] sm:$0xff]
    %v167 = vld [vmem:[#allocation5 + $0x140] sm:$0xff]
    %v168 = vld [vmem:[#allocation5 + $0x148] sm:$0xff]
    %v169 = vld [vmem:[#allocation5 + $0x150] sm:$0xff]
    %v170 = vld [vmem:[#allocation5 + $0x158] sm:$0xff]
    %v171 = vld [vmem:[#allocation5 + $0x160] sm:$0xff]
    %v172 = vld [vmem:[#allocation5 + $0x168] sm:$0xff]
    %v173 = vld [vmem:[#allocation5 + $0x170] sm:$0xff]
    %v174 = vld [vmem:[#allocation5 + $0x178] sm:$0xff]
    %v175 = vld [vmem:[#allocation5 + $0x180] sm:$0xff]
    %v176 = vld [vmem:[#allocation5 + $0x188] sm:$0xff]
    %v177 = vld [vmem:[#allocation5 + $0x190] sm:$0xff]
    %v178 = vld [vmem:[#allocation5 + $0x198] sm:$0xff]
    %v179 = vld [vmem:[#allocation5 + $0x1a0] sm:$0xff]
    %v180 = vld [vmem:[#allocation5 + $0x1a8] sm:$0xff]
    %v181 = vld [vmem:[#allocation5 + $0x1b0] sm:$0xff]
    %v182 = vld [vmem:[#allocation5 + $0x1b8] sm:$0xff]
    %v183 = vld [vmem:[#allocation5 + $0x1c0] sm:$0xff]
    %v184 = vld [vmem:[#allocation5 + $0x1c8] sm:$0xff]
    %v185 = vld [vmem:[#allocation5 + $0x1d0] sm:$0xff]
    %v186 = vld [vmem:[#allocation5 + $0x1d8] sm:$0xff]
    %v187 = vld [vmem:[#allocation5 + $0x1e0] sm:$0xff]
    %v188 = vld [vmem:[#allocation5 + $0x1e8] sm:$0xff]
    %v189 = vld [vmem:[#allocation5 + $0x1f0] sm:$0xff]
    %v190 = vld [vmem:[#allocation5 + $0x1f8] sm:$0xff]
    %v191 = vld [vmem:[#allocation7] sm:$0xff]
    %v193 = vlaneseq
    %v194 = vshrl.u32 %v193, 7
    %v195 = vsub.s32 0, %v194
    %v196 = vrot.slane %v191, %v195
    %v197 = vlaneseq
    %v198 = vshrl.u32 %v197, 7
    %v199 = vsub.s32 1, %v198
    %v200 = vrot.slane %v191, %v199
    %v201 = vlaneseq
    %v202 = vshrl.u32 %v201, 7
    %v203 = vsub.s32 2, %v202
    %v204 = vrot.slane %v191, %v203
    %v205 = vlaneseq
    %v206 = vshrl.u32 %v205, 7
    %v207 = vsub.s32 3, %v206
    %v208 = vrot.slane %v191, %v207
    %v209 = vlaneseq
    %v210 = vshrl.u32 %v209, 7
    %v211 = vsub.s32 4, %v210
    %v212 = vrot.slane %v191, %v211
    %v213 = vlaneseq
    %v214 = vshrl.u32 %v213, 7
    %v215 = vsub.s32 5, %v214
    %v216 = vrot.slane %v191, %v215
    %v217 = vlaneseq
    %v218 = vshrl.u32 %v217, 7
    %v219 = vsub.s32 6, %v218
    %v220 = vrot.slane %v191, %v219
    %v221 = vlaneseq
    %v222 = vshrl.u32 %v221, 7
    %v223 = vsub.s32 7, %v222
    %v224 = vrot.slane %v191, %v223
    %v241 = vunpack.c.l.b16 %v119
    %v242 = vunpack.c.l.b16 %v120
    %v243 = vunpack.c.l.b16 %v121
    %v244 = vunpack.c.l.b16 %v122
    %v245 = vunpack.c.l.b16 %v123
    %v246 = vunpack.c.l.b16 %v124
    %v247 = vunpack.c.l.b16 %v125
    %v248 = vunpack.c.l.b16 %v126
    %vm249 = vcmask 1041409
    %v250 = vsel %vm249, %v242, %v241
    %vm251 = vcmask 1042434
    %v252 = vsel %vm251, %v243, %v250
    %vm253 = vcmask 1043459
    %v254 = vsel %vm253, %v244, %v252
    %vm255 = vcmask 1044484
    %v256 = vsel %vm255, %v245, %v254
    %vm257 = vcmask 1045509
    %v258 = vsel %vm257, %v246, %v256
    %vm259 = vcmask 1046534
    %v260 = vsel %vm259, %v247, %v258
    %vm261 = vcmask 1047559
    %v262 = vsel %vm261, %v248, %v260
    %v263 = vpack.c.b16 %v262, %v262
    %v329 = vunpack.c.l.b16 %v127
    %v330 = vunpack.c.h.b16 %v127
    %v331 = vunpack.c.l.b16 %v128
    %v332 = vunpack.c.h.b16 %v128
    %v333 = vunpack.c.l.b16 %v129
    %v334 = vunpack.c.h.b16 %v129
    %v335 = vunpack.c.l.b16 %v130
    %v336 = vunpack.c.h.b16 %v130
    %v337 = vunpack.c.l.b16 %v131
    %v338 = vunpack.c.h.b16 %v131
    %v339 = vunpack.c.l.b16 %v132
    %v340 = vunpack.c.h.b16 %v132
    %v341 = vunpack.c.l.b16 %v133
    %v342 = vunpack.c.h.b16 %v133
    %v343 = vunpack.c.l.b16 %v134
    %v344 = vunpack.c.h.b16 %v134
    %v345 = vunpack.c.l.b16 %v135
    %v346 = vunpack.c.h.b16 %v135
    %v347 = vunpack.c.l.b16 %v136
    %v348 = vunpack.c.h.b16 %v136
    %v349 = vunpack.c.l.b16 %v137
    %v350 = vunpack.c.h.b16 %v137
    %v351 = vunpack.c.l.b16 %v138
    %v352 = vunpack.c.h.b16 %v138
    %v353 = vunpack.c.l.b16 %v139
    %v354 = vunpack.c.h.b16 %v139
    %v355 = vunpack.c.l.b16 %v140
    %v356 = vunpack.c.h.b16 %v140
    %v357 = vunpack.c.l.b16 %v141
    %v358 = vunpack.c.h.b16 %v141
    %v359 = vunpack.c.l.b16 %v142
    %v360 = vunpack.c.h.b16 %v142
    %v361 = vunpack.c.l.b16 %v143
    %v362 = vunpack.c.h.b16 %v143
    %v363 = vunpack.c.l.b16 %v144
    %v364 = vunpack.c.h.b16 %v144
    %v365 = vunpack.c.l.b16 %v145
    %v366 = vunpack.c.h.b16 %v145
    %v367 = vunpack.c.l.b16 %v146
    %v368 = vunpack.c.h.b16 %v146
    %v369 = vunpack.c.l.b16 %v147
    %v370 = vunpack.c.h.b16 %v147
    %v371 = vunpack.c.l.b16 %v148
    %v372 = vunpack.c.h.b16 %v148
    %v373 = vunpack.c.l.b16 %v149
    %v374 = vunpack.c.h.b16 %v149
    %v375 = vunpack.c.l.b16 %v150
    %v376 = vunpack.c.h.b16 %v150
    %v377 = vunpack.c.l.b16 %v151
    %v378 = vunpack.c.h.b16 %v151
    %v379 = vunpack.c.l.b16 %v152
    %v380 = vunpack.c.h.b16 %v152
    %v381 = vunpack.c.l.b16 %v153
    %v382 = vunpack.c.h.b16 %v153
    %v383 = vunpack.c.l.b16 %v154
    %v384 = vunpack.c.h.b16 %v154
    %v385 = vunpack.c.l.b16 %v155
    %v386 = vunpack.c.h.b16 %v155
    %v387 = vunpack.c.l.b16 %v156
    %v388 = vunpack.c.h.b16 %v156
    %v389 = vunpack.c.l.b16 %v157
    %v390 = vunpack.c.h.b16 %v157
    %v391 = vunpack.c.l.b16 %v158
    %v392 = vunpack.c.h.b16 %v158
    %v393 = vunpack.c.l.b16 %v159
    %v394 = vunpack.c.h.b16 %v159
    %v395 = vunpack.c.l.b16 %v160
    %v396 = vunpack.c.h.b16 %v160
    %v397 = vunpack.c.l.b16 %v161
    %v398 = vunpack.c.h.b16 %v161
    %v399 = vunpack.c.l.b16 %v162
    %v400 = vunpack.c.h.b16 %v162
    %v401 = vunpack.c.l.b16 %v163
    %v402 = vunpack.c.h.b16 %v163
    %v403 = vunpack.c.l.b16 %v164
    %v404 = vunpack.c.h.b16 %v164
    %v405 = vunpack.c.l.b16 %v165
    %v406 = vunpack.c.h.b16 %v165
    %v407 = vunpack.c.l.b16 %v166
    %v408 = vunpack.c.h.b16 %v166
    %v409 = vunpack.c.l.b16 %v167
    %v410 = vunpack.c.h.b16 %v167
    %v411 = vunpack.c.l.b16 %v168
    %v412 = vunpack.c.h.b16 %v168
    %v413 = vunpack.c.l.b16 %v169
    %v414 = vunpack.c.h.b16 %v169
    %v415 = vunpack.c.l.b16 %v170
    %v416 = vunpack.c.h.b16 %v170
    %v417 = vunpack.c.l.b16 %v171
    %v418 = vunpack.c.h.b16 %v171
    %v419 = vunpack.c.l.b16 %v172
    %v420 = vunpack.c.h.b16 %v172
    %v421 = vunpack.c.l.b16 %v173
    %v422 = vunpack.c.h.b16 %v173
    %v423 = vunpack.c.l.b16 %v174
    %v424 = vunpack.c.h.b16 %v174
    %v425 = vunpack.c.l.b16 %v175
    %v426 = vunpack.c.h.b16 %v175
    %v427 = vunpack.c.l.b16 %v176
    %v428 = vunpack.c.h.b16 %v176
    %v429 = vunpack.c.l.b16 %v177
    %v430 = vunpack.c.h.b16 %v177
    %v431 = vunpack.c.l.b16 %v178
    %v432 = vunpack.c.h.b16 %v178
    %v433 = vunpack.c.l.b16 %v179
    %v434 = vunpack.c.h.b16 %v179
    %v435 = vunpack.c.l.b16 %v180
    %v436 = vunpack.c.h.b16 %v180
    %v437 = vunpack.c.l.b16 %v181
    %v438 = vunpack.c.h.b16 %v181
    %v439 = vunpack.c.l.b16 %v182
    %v440 = vunpack.c.h.b16 %v182
    %v441 = vunpack.c.l.b16 %v183
    %v442 = vunpack.c.h.b16 %v183
    %v443 = vunpack.c.l.b16 %v184
    %v444 = vunpack.c.h.b16 %v184
    %v445 = vunpack.c.l.b16 %v185
    %v446 = vunpack.c.h.b16 %v185
    %v447 = vunpack.c.l.b16 %v186
    %v448 = vunpack.c.h.b16 %v186
    %v449 = vunpack.c.l.b16 %v187
    %v450 = vunpack.c.h.b16 %v187
    %v451 = vunpack.c.l.b16 %v188
    %v452 = vunpack.c.h.b16 %v188
    %v453 = vunpack.c.l.b16 %v189
    %v454 = vunpack.c.h.b16 %v189
    %v455 = vunpack.c.l.b16 %v190
    %v456 = vunpack.c.h.b16 %v190
    %v457 = vpack.c.b16 %v337, %v329
    %v458 = vpack.c.b16 %v338, %v330
    %v459 = vpack.c.b16 %v339, %v331
    %v460 = vpack.c.b16 %v340, %v332
    %v461 = vpack.c.b16 %v341, %v333
    %v462 = vpack.c.b16 %v342, %v334
    %v463 = vpack.c.b16 %v343, %v335
    %v464 = vpack.c.b16 %v344, %v336
    %v465 = vpack.c.b16 %v353, %v345
    %v466 = vpack.c.b16 %v354, %v346
    %v467 = vpack.c.b16 %v355, %v347
    %v468 = vpack.c.b16 %v356, %v348
    %v469 = vpack.c.b16 %v357, %v349
    %v470 = vpack.c.b16 %v358, %v350
    %v471 = vpack.c.b16 %v359, %v351
    %v472 = vpack.c.b16 %v360, %v352
    %v473 = vpack.c.b16 %v369, %v361
    %v474 = vpack.c.b16 %v370, %v362
    %v475 = vpack.c.b16 %v371, %v363
    %v476 = vpack.c.b16 %v372, %v364
    %v477 = vpack.c.b16 %v373, %v365
    %v478 = vpack.c.b16 %v374, %v366
    %v479 = vpack.c.b16 %v375, %v367
    %v480 = vpack.c.b16 %v376, %v368
    %v481 = vpack.c.b16 %v385, %v377
    %v482 = vpack.c.b16 %v386, %v378
    %v483 = vpack.c.b16 %v387, %v379
    %v484 = vpack.c.b16 %v388, %v380
    %v485 = vpack.c.b16 %v389, %v381
    %v486 = vpack.c.b16 %v390, %v382
    %v487 = vpack.c.b16 %v391, %v383
    %v488 = vpack.c.b16 %v392, %v384
    %v489 = vpack.c.b16 %v401, %v393
    %v490 = vpack.c.b16 %v402, %v394
    %v491 = vpack.c.b16 %v403, %v395
    %v492 = vpack.c.b16 %v404, %v396
    %v493 = vpack.c.b16 %v405, %v397
    %v494 = vpack.c.b16 %v406, %v398
    %v495 = vpack.c.b16 %v407, %v399
    %v496 = vpack.c.b16 %v408, %v400
    %v497 = vpack.c.b16 %v417, %v409
    %v498 = vpack.c.b16 %v418, %v410
    %v499 = vpack.c.b16 %v419, %v411
    %v500 = vpack.c.b16 %v420, %v412
    %v501 = vpack.c.b16 %v421, %v413
    %v502 = vpack.c.b16 %v422, %v414
    %v503 = vpack.c.b16 %v423, %v415
    %v504 = vpack.c.b16 %v424, %v416
    %v505 = vpack.c.b16 %v433, %v425
    %v506 = vpack.c.b16 %v434, %v426
    %v507 = vpack.c.b16 %v435, %v427
    %v508 = vpack.c.b16 %v436, %v428
    %v509 = vpack.c.b16 %v437, %v429
    %v510 = vpack.c.b16 %v438, %v430
    %v511 = vpack.c.b16 %v439, %v431
    %v512 = vpack.c.b16 %v440, %v432
    %v513 = vpack.c.b16 %v449, %v441
    %v514 = vpack.c.b16 %v450, %v442
    %v515 = vpack.c.b16 %v451, %v443
    %v516 = vpack.c.b16 %v452, %v444
    %v517 = vpack.c.b16 %v453, %v445
    %v518 = vpack.c.b16 %v454, %v446
    %v519 = vpack.c.b16 %v455, %v447
    %v520 = vpack.c.b16 %v456, %v448
    %585 = vmatprep.subr.bf16.mxu0 %v514
    %586 = vmatpush1.bf16.msra.mxu0 %v513
    %587 = vmatprep.subr.bf16.mxu0 %v506
    %588 = vmatpush1.bf16.msra.mxu0 %v505
    %589 = vmatprep.subr.bf16.mxu0 %v498
    %590 = vmatpush1.bf16.msra.mxu0 %v497
    %591 = vmatprep.subr.bf16.mxu0 %v490
    %592 = vmatpush1.bf16.msra.mxu0 %v489
    %593 = vmatprep.subr.bf16.mxu0 %v482
    %594 = vmatpush1.bf16.msra.mxu0 %v481
    %595 = vmatprep.subr.bf16.mxu0 %v474
    %596 = vmatpush1.bf16.msra.mxu0 %v473
    %597 = vmatprep.subr.bf16.mxu0 %v466
    %598 = vmatpush1.bf16.msra.mxu0 %v465
    %599 = vmatprep.subr.bf16.mxu0 %v458
    %600 = vmatpush1.bf16.msra.mxu0 %v457
    %601 = vmatprep.subr.bf16.mxu0 0
    %602 = vmatpush2.bf16.msra.mxu0 0
    %603 = vmatprep.subr.bf16.mxu0 0
    %604 = vmatpush2.bf16.msra.mxu0 0
    %605 = vmatprep.subr.bf16.mxu0 0
    %606 = vmatpush2.bf16.msra.mxu0 0
    %607 = vmatprep.subr.bf16.mxu0 0
    %608 = vmatpush2.bf16.msra.mxu0 0
    %609 = vmatprep.subr.bf16.mxu0 0
    %610 = vmatpush2.bf16.msra.mxu0 0
    %611 = vmatprep.subr.bf16.mxu0 0
    %612 = vmatpush2.bf16.msra.mxu0 0
    %613 = vmatprep.subr.bf16.mxu0 0
    %614 = vmatpush2.bf16.msra.mxu0 0
    %615 = vmatprep.subr.bf16.mxu0 0
    %616 = vmatpush2.bf16.msra.mxu0 0
    %617 = vmatprep.mubr.bf16.mxu0 0
    %618 = vmatmul.mubr.bf16.gmra.mxu0 %v263
    %v619 = vpop.f32.mrf.mxu0
    %v620 = vadd.f32 %v196, %v619
    %v621 = vpop.f32.mrf.mxu0
    %v622 = vadd.f32 %v200, %v621
    %v623 = vpop.f32.mrf.mxu0
    %v624 = vpop.f32.mrf.mxu0
    %625 = vdwg.mxu0
    %626 = vmatprep.subr.bf16.mxu0 %v516
    %627 = vmatpush1.bf16.msra.mxu0 %v515
    %628 = vmatprep.subr.bf16.mxu0 %v508
    %629 = vmatpush1.bf16.msra.mxu0 %v507
    %630 = vmatprep.subr.bf16.mxu0 %v500
    %631 = vmatpush1.bf16.msra.mxu0 %v499
    %632 = vmatprep.subr.bf16.mxu0 %v492
    %633 = vmatpush1.bf16.msra.mxu0 %v491
    %634 = vmatprep.subr.bf16.mxu0 %v484
    %635 = vmatpush1.bf16.msra.mxu0 %v483
    %636 = vmatprep.subr.bf16.mxu0 %v476
    %637 = vmatpush1.bf16.msra.mxu0 %v475
    %638 = vmatprep.subr.bf16.mxu0 %v468
    %639 = vmatpush1.bf16.msra.mxu0 %v467
    %640 = vmatprep.subr.bf16.mxu0 %v460
    %641 = vmatpush1.bf16.msra.mxu0 %v459
    %642 = vmatprep.subr.bf16.mxu0 0
    %643 = vmatpush2.bf16.msra.mxu0 0
    %644 = vmatprep.subr.bf16.mxu0 0
    %645 = vmatpush2.bf16.msra.mxu0 0
    %646 = vmatprep.subr.bf16.mxu0 0
    %647 = vmatpush2.bf16.msra.mxu0 0
    %648 = vmatprep.subr.bf16.mxu0 0
    %649 = vmatpush2.bf16.msra.mxu0 0
    %650 = vmatprep.subr.bf16.mxu0 0
    %651 = vmatpush2.bf16.msra.mxu0 0
    %652 = vmatprep.subr.bf16.mxu0 0
    %653 = vmatpush2.bf16.msra.mxu0 0
    %654 = vmatprep.subr.bf16.mxu0 0
    %655 = vmatpush2.bf16.msra.mxu0 0
    %656 = vmatprep.subr.bf16.mxu0 0
    %657 = vmatpush2.bf16.msra.mxu0 0
    %658 = vmatprep.mubr.bf16.mxu0 0
    %659 = vmatmul.mubr.bf16.gmra.mxu0 %v263
    %v660 = vpop.f32.mrf.mxu0
    %v661 = vadd.f32 %v204, %v660
    %v662 = vpop.f32.mrf.mxu0
    %v663 = vadd.f32 %v208, %v662
    %v664 = vpop.f32.mrf.mxu0
    %v665 = vpop.f32.mrf.mxu0
    %666 = vdwg.mxu0
    %667 = vmatprep.subr.bf16.mxu0 %v518
    %668 = vmatpush1.bf16.msra.mxu0 %v517
    %669 = vmatprep.subr.bf16.mxu0 %v510
    %670 = vmatpush1.bf16.msra.mxu0 %v509
    %671 = vmatprep.subr.bf16.mxu0 %v502
    %672 = vmatpush1.bf16.msra.mxu0 %v501
    %673 = vmatprep.subr.bf16.mxu0 %v494
    %674 = vmatpush1.bf16.msra.mxu0 %v493
    %675 = vmatprep.subr.bf16.mxu0 %v486
    %676 = vmatpush1.bf16.msra.mxu0 %v485
    %677 = vmatprep.subr.bf16.mxu0 %v478
    %678 = vmatpush1.bf16.msra.mxu0 %v477
    %679 = vmatprep.subr.bf16.mxu0 %v470
    %680 = vmatpush1.bf16.msra.mxu0 %v469
    %681 = vmatprep.subr.bf16.mxu0 %v462
    %682 = vmatpush1.bf16.msra.mxu0 %v461
    %683 = vmatprep.subr.bf16.mxu0 0
    %684 = vmatpush2.bf16.msra.mxu0 0
    %685 = vmatprep.subr.bf16.mxu0 0
    %686 = vmatpush2.bf16.msra.mxu0 0
    %687 = vmatprep.subr.bf16.mxu0 0
    %688 = vmatpush2.bf16.msra.mxu0 0
    %689 = vmatprep.subr.bf16.mxu0 0
    %690 = vmatpush2.bf16.msra.mxu0 0
    %691 = vmatprep.subr.bf16.mxu0 0
    %692 = vmatpush2.bf16.msra.mxu0 0
    %693 = vmatprep.subr.bf16.mxu0 0
    %694 = vmatpush2.bf16.msra.mxu0 0
    %695 = vmatprep.subr.bf16.mxu0 0
    %696 = vmatpush2.bf16.msra.mxu0 0
    %697 = vmatprep.subr.bf16.mxu0 0
    %698 = vmatpush2.bf16.msra.mxu0 0
    %699 = vmatprep.mubr.bf16.mxu0 0
    %700 = vmatmul.mubr.bf16.gmra.mxu0 %v263
    %v701 = vpop.f32.mrf.mxu0
    %v702 = vadd.f32 %v212, %v701
    %v703 = vpop.f32.mrf.mxu0
    %v704 = vadd.f32 %v216, %v703
    %v705 = vpop.f32.mrf.mxu0
    %v706 = vpop.f32.mrf.mxu0
    %707 = vdwg.mxu0
    %708 = vmatprep.subr.bf16.mxu0 %v520
    %709 = vmatpush1.bf16.msra.mxu0 %v519
    %710 = vmatprep.subr.bf16.mxu0 %v512
    %711 = vmatpush1.bf16.msra.mxu0 %v511
    %712 = vmatprep.subr.bf16.mxu0 %v504
    %713 = vmatpush1.bf16.msra.mxu0 %v503
    %714 = vmatprep.subr.bf16.mxu0 %v496
    %715 = vmatpush1.bf16.msra.mxu0 %v495
    %716 = vmatprep.subr.bf16.mxu0 %v488
    %717 = vmatpush1.bf16.msra.mxu0 %v487
    %718 = vmatprep.subr.bf16.mxu0 %v480
    %719 = vmatpush1.bf16.msra.mxu0 %v479
    %720 = vmatprep.subr.bf16.mxu0 %v472
    %721 = vmatpush1.bf16.msra.mxu0 %v471
    %722 = vmatprep.subr.bf16.mxu0 %v464
    %723 = vmatpush1.bf16.msra.mxu0 %v463
    %724 = vmatprep.subr.bf16.mxu0 0
    %725 = vmatpush2.bf16.msra.mxu0 0
    %726 = vmatprep.subr.bf16.mxu0 0
    %727 = vmatpush2.bf16.msra.mxu0 0
    %728 = vmatprep.subr.bf16.mxu0 0
    %729 = vmatpush2.bf16.msra.mxu0 0
    %730 = vmatprep.subr.bf16.mxu0 0
    %731 = vmatpush2.bf16.msra.mxu0 0
    %732 = vmatprep.subr.bf16.mxu0 0
    %733 = vmatpush2.bf16.msra.mxu0 0
    %734 = vmatprep.subr.bf16.mxu0 0
    %735 = vmatpush2.bf16.msra.mxu0 0
    %736 = vmatprep.subr.bf16.mxu0 0
    %737 = vmatpush2.bf16.msra.mxu0 0
    %738 = vmatprep.subr.bf16.mxu0 0
    %739 = vmatpush2.bf16.msra.mxu0 0
    %740 = vmatprep.mubr.bf16.mxu0 0
    %741 = vmatmul.mubr.bf16.gmra.mxu0 %v263
    %v742 = vpop.f32.mrf.mxu0
    %v743 = vadd.f32 %v220, %v742
    %v744 = vpop.f32.mrf.mxu0
    %v745 = vadd.f32 %v224, %v744
    %v746 = vpop.f32.mrf.mxu0
    %v747 = vpop.f32.mrf.mxu0
    %748 = vdwg.mxu0
    %749 = vst [vmem:[#allocation8] sm:$0xff] %v620
    %750 = vst [vmem:[#allocation8 + $0x8] sm:$0xff] %v622
    %751 = vst [vmem:[#allocation8 + $0x10] sm:$0xff] %v661
    %752 = vst [vmem:[#allocation8 + $0x18] sm:$0xff] %v663
    %753 = vst [vmem:[#allocation8 + $0x20] sm:$0xff] %v702
    %754 = vst [vmem:[#allocation8 + $0x28] sm:$0xff] %v704
    %755 = vst [vmem:[#allocation8 + $0x30] sm:$0xff] %v743
    %756 = vst [vmem:[#allocation8 + $0x38] sm:$0xff] %v745
    // Predicated region
    $region26: #{tpu_custom_call.1} parent=1 // pred_check
      _
    $region27: #{tpu_custom_call.1} parent=1 // pred_check_branch
      %758 = sbr.rel (0) target = $region29
    $region28: #{tpu_custom_call.1} parent=1 // pred_region
      %s760 = ssub.s32 1024, 1024
      %761 = vsyncadd [#allocation4], %s760
      %s763 = sshll.u32 [#allocation8], 4
      %s764 = int_to_ptr.vmem [resolvable:$true] %s763
      %766 = dma.vmem_to_hbm [thread:$0]  %s764, 1024, %s3, [#allocation4]
    $region29: #{tpu_custom_call.1} parent=1 // pred_fallthru
      _
    // Predicated region
    $region30: #{tpu_custom_call.1} parent=1 // pred_check
      _
    $region31: #{tpu_custom_call.1} parent=1 // pred_check_branch
      %768 = sbr.rel (0) target = $region33
    $region32: #{tpu_custom_call.1} parent=1 // pred_region
      %769 = dma.done [#allocation4], 1024
    $region33: #{tpu_custom_call.1} parent=1 // pred_fallthru
      _
    %770 = vsyncpa [#allocation3], 1
    %771 = vsyncpa [#allocation6], 1
    %772 = vsyncpa [#allocation4], 1

</llo_original>
